<compile_context>
chip_gen: v6e
topology: v6e:2x2x1
jax: 0.10.0
libtpu: 0.0.40
codegen_flags: <defaults>
</compile_context>

<pallas_src>
import jax
import jax.numpy as jnp
from jax.experimental import pallas as pl
from jax.experimental.pallas import tpu as pltpu

IN_DIM = 7                 # KANLayer in_dim
OUT_DIM = 24               # KANLayer out_dim
NUM = 5                    # KAN grid intervals (pykan default)
K = 3                      # KAN spline order (pykan default)
N_BASIS = NUM + K          # 8 B-spline basis functions per input dim
N_GRID = NUM + 2 * K + 1   # 12 extended knots per input dim
N_SCALES = 3               # image scales of the encoder stand-in
H_GRID = 2.0 / NUM         # uniform knot spacing
KAN_FEATS = IN_DIM * N_BASIS + IN_DIM   # 63 = spline basis + silu base

# ---- packed small-parameter column vector (PV_ROWS, 1) f32 ------------------
PV_BIMG = 0                              # rows  0:72  per-scale projection biases
PV_WF_IMG = PV_BIMG + N_SCALES * OUT_DIM  # rows 72:96  fin_cls weights, image half
PV_WF_TAB = PV_WF_IMG + OUT_DIM           # rows 96:120 fin_cls weights, tab half
PV_BF = PV_WF_TAB + OUT_DIM               # row  120    fin_cls bias
PV_ROWS = 128


def mmcaf_kernel(x_ref, tab_ref, wimg_ref, wk_ref, pv_ref, out_ref):
    tab_t = tab_ref[...]                                   # (7, bt) f32, batch on lanes

    # ---- KANLayer(7 -> 24): Cox-de Boor recursion, batch lane-dense --------
    x = tab_t[:, None, :]                                  # (7, 1, bt)
    # Uniform knots generated in-kernel: g_j = j*h - (1 + K*h), j = 0..N_GRID-1.
    j = jax.lax.broadcasted_iota(jnp.int32, (1, N_GRID, 1), 1).astype(jnp.float32)
    g = j * H_GRID - (1.0 + K * H_GRID)                    # (1, 12, 1)
    val = ((x >= g[:, :-1, :]) & (x < g[:, 1:, :])).astype(jnp.float32)  # (7, 11, bt)
    for p in range(1, K + 1):                              # uniform grid => denom = p*h
        inv_ph = 1.0 / (p * H_GRID)
        val = ((x - g[:, :-(p + 1), :]) * inv_ph * val[:, :-1, :]
               + (g[:, p + 1:, :] - x) * inv_ph * val[:, 1:, :])
    # val: (7, 8, bt) -> contiguous (56, bt); append SiLU base features.
    silu_t = tab_t * (0.5 * (jnp.tanh(0.5 * tab_t) + 1.0))            # SiLU via tanh (EUP)
    feats = jnp.concatenate(
        [val.reshape(IN_DIM * N_BASIS, val.shape[-1]), silu_t], axis=0)  # (63, bt)
    q_t = jnp.dot(wk_ref[...], feats.astype(jnp.bfloat16),
                  preferred_element_type=jnp.float32)                  # (24, bt)

    # ---- image encoder stand-in: one bf16 matmul, pooling folded into W ----
    f_all = jnp.dot(wimg_ref[...], x_ref[...],
                    preferred_element_type=jnp.float32)                # (72, bt)
    f_all = jnp.maximum(f_all + pv_ref[PV_BIMG:PV_BIMG + N_SCALES * OUT_DIM, :], 0.0)
    f0 = f_all[0:OUT_DIM, :]                                           # sublane-aligned
    f1 = f_all[OUT_DIM:2 * OUT_DIM, :]
    f2 = f_all[2 * OUT_DIM:3 * OUT_DIM, :]

    # ---- multiscale fusion: tab-query attention over the 3 image scales ----
    scale = 1.0 / (float(OUT_DIM) ** 0.5)
    s0 = jnp.sum(q_t * f0, axis=0, keepdims=True) * scale              # (1, bt)
    s1 = jnp.sum(q_t * f1, axis=0, keepdims=True) * scale
    s2 = jnp.sum(q_t * f2, axis=0, keepdims=True) * scale
    m = jnp.maximum(s0, jnp.maximum(s1, s2))
    e0 = jnp.exp(s0 - m)
    e1 = jnp.exp(s1 - m)
    e2 = jnp.exp(s2 - m)
    inv_den = pl.reciprocal(e0 + e1 + e2, approx=True)                  # EUP
    fused = (e0 * f0 + e1 * f1 + e2 * f2) * inv_den                     # (24, bt)

    # ---- fin_cls: Linear(48, 1) on concat([fused, q]); concat avoided ------
    wf_img = pv_ref[PV_WF_IMG:PV_WF_IMG + OUT_DIM, :]                   # (24, 1)
    wf_tab = pv_ref[PV_WF_TAB:PV_WF_TAB + OUT_DIM, :]                   # (24, 1)
    pred = (jnp.sum(fused * wf_img, axis=0, keepdims=True)
            + jnp.sum(q_t * wf_tab, axis=0, keepdims=True)
            + pv_ref[PV_BF:PV_BF + 1, :])
    out_ref[...] = pred                                                 # (1, bt) lane-dense


# ------------------------------ host-side glue -------------------------------
def _pool_matrix(C, H, W, k):
    """(C*H*W, C*(H//k)*(W//k)) average-pooling operator on NCHW-flattened rows."""
    Hs, Ws = H // k, W // k
    src = (jnp.arange(C)[:, None, None] * (H * W)
           + jnp.arange(H)[None, :, None] * W
           + jnp.arange(W)[None, None, :]).reshape(-1)
    dst = (jnp.arange(C)[:, None, None] * (Hs * Ws)
           + (jnp.arange(H) // k)[None, :, None] * Ws
           + (jnp.arange(W) // k)[None, None, :]).reshape(-1)
    P = jnp.zeros((C * H * W, C * Hs * Ws), jnp.float32)
    return P.at[src, dst].add(1.0 / (k * k))


def make_params(key, C=1, H=16, W=16):
    ks = jax.random.split(key, 6)
    coef = 0.1 * jax.random.normal(ks[0], (IN_DIM, N_BASIS, OUT_DIM), jnp.float32)
    scale_base = (1.0 / jnp.sqrt(jnp.float32(IN_DIM))) * (
        1.0 + 0.1 * jax.random.normal(ks[1], (IN_DIM, OUT_DIM), jnp.float32))
    scale_sp = jnp.ones((IN_DIM, OUT_DIM), jnp.float32) / jnp.sqrt(jnp.float32(IN_DIM))
    kan_mask = jnp.ones((IN_DIM, OUT_DIM), jnp.float32)

    def lin(k, fan_in, fan_out):
        lim = 1.0 / float(fan_in) ** 0.5
        kw, kb = jax.random.split(k)
        w = jax.random.uniform(kw, (fan_in, fan_out), jnp.float32, -lim, lim)
        b = jax.random.uniform(kb, (1, fan_out), jnp.float32, -lim, lim)
        return w, b

    w0, b0 = lin(ks[2], C * H * W, OUT_DIM)
    w1, b1 = lin(ks[3], C * (H // 2) * (W // 2), OUT_DIM)
    w2, b2 = lin(ks[4], C * (H // 4) * (W // 4), OUT_DIM)
    wf, bf = lin(ks[5], 2 * OUT_DIM, 1)
    return dict(coef=coef, scale_base=scale_base, scale_sp=scale_sp, mask=kan_mask,
                w0=w0, b0=b0, w1=w1, b1=b1, w2=w2, b2=b2, wf=wf, bf=bf)


def pack_params(p, C, H, W):
    """Algebraic folding + packing (done once, host-side)."""
    # KAN: fold mask*scale_sp into coef and mask*scale_base into a base weight,
    # transpose so the kernel's matmul is (24, 63) @ (63, bt).
    coef_eff = (p["coef"] * (p["mask"] * p["scale_sp"])[:, None, :]
                ).reshape(IN_DIM * N_BASIS, OUT_DIM)                    # (56, 24), i-major
    w_base = p["mask"] * p["scale_base"]                                # (7, 24)
    wk_t = jnp.concatenate([coef_eff, w_base], axis=0).T                # (24, 63)

    # Image-encoder stand-in: fold the (linear) average pooling into the
    # per-scale projection weights; transpose so the kernel computes (72,D)@(D,bt).
    w_img = jnp.concatenate(
        [p["w0"],
         _pool_matrix(C, H, W, 2) @ p["w1"],
         _pool_matrix(C, H, W, 4) @ p["w2"]], axis=1)                   # (D, 72)
    w_img_t = w_img.T                                                   # (72, D)

    b_img = jnp.concatenate([p["b0"], p["b1"], p["b2"]], axis=1).reshape(-1)  # (72,)
    wf = p["wf"].reshape(-1)                                            # (48,): [img | tab]
    pvec = jnp.zeros((PV_ROWS, 1), jnp.float32)
    pvec = pvec.at[PV_BIMG:PV_BIMG + N_SCALES * OUT_DIM, 0].set(b_img)
    pvec = pvec.at[PV_WF_IMG:PV_WF_IMG + OUT_DIM, 0].set(wf[:OUT_DIM])
    pvec = pvec.at[PV_WF_TAB:PV_WF_TAB + OUT_DIM, 0].set(wf[OUT_DIM:])
    pvec = pvec.at[PV_BF, 0].set(p["bf"][0, 0])
    return {"w_img_t": w_img_t.astype(jnp.bfloat16),
            "wk_t": wk_t.astype(jnp.bfloat16),
            "pvec": pvec}


def _choose_bt(B):
    # Lane-dense batch tile; prefer >= 4 grid steps so both v7x TCs pipeline.
    for bt in (512, 256, 128):
        if B >= 4 * bt:
            return bt
    return 128


@jax.jit
def mmcaf_forward(i_nchw, tab, packed):
    B, C, H, W = i_nchw.shape
    D = C * H * W
    w_img_t = packed["w_img_t"]
    wk_t = packed["wk_t"]
    pvec = packed["pvec"]

    bt = _choose_bt(B)
    B_pad = ((B + bt - 1) // bt) * bt

    # Batch-on-lanes inputs (transposed host-side); pad batch to a tile multiple.
    x_t = i_nchw.reshape(B, D).T.astype(jnp.bfloat16)       # (D, B) bf16 MXU operand
    tab_t = tab.astype(jnp.float32).T                       # (7, B)
    if B_pad != B:
        x_t = jnp.pad(x_t, ((0, 0), (0, B_pad - B)))
        tab_t = jnp.pad(tab_t, ((0, 0), (0, B_pad - B)))

    grid = (B_pad // bt,)
    out = pl.pallas_call(
        mmcaf_kernel,
        out_shape=jax.ShapeDtypeStruct((1, B_pad), jnp.float32),
        grid_spec=pltpu.PrefetchScalarGridSpec(
            num_scalar_prefetch=0,
            grid=grid,
            in_specs=[
                pl.BlockSpec((D, bt), lambda b: (0, b)),                    # x (bf16, batch on lanes)
                pl.BlockSpec((IN_DIM, bt), lambda b: (0, b)),               # tab (f32)
                pl.BlockSpec((N_SCALES * OUT_DIM, D), lambda b: (0, 0)),    # W_img^T (bf16)
                pl.BlockSpec((OUT_DIM, KAN_FEATS), lambda b: (0, 0)),       # W_kan^T (bf16)
                pl.BlockSpec((PV_ROWS, 1), lambda b: (0, 0)),               # packed small params
            ],
            out_specs=pl.BlockSpec((1, bt), lambda b: (0, b)),              # lane-dense output
        ),
        compiler_params=pltpu.CompilerParams(
            dimension_semantics=("parallel",)),
    )(x_t, tab_t, w_img_t, wk_t, pvec)

    return out[0, :B].reshape(B, 1)


if __name__ == "__main__":
    key = jax.random.PRNGKey(0)
    k_img, k_tab, k_par = jax.random.split(key, 3)

    B, C, H, W = 2, 1, 16, 16
    img = jax.random.normal(k_img, (B, C, H, W), jnp.float32)              # i
    tab = jax.random.uniform(k_tab, (B, IN_DIM), jnp.float32,
                             minval=-1.0, maxval=1.0)                      # tab
    raw_params = make_params(k_par, C, H, W)
    packed = pack_params(raw_params, C, H, W)

    pred = mmcaf_forward(img, tab, packed)
    jax.block_until_ready(pred)
    assert pred.shape == (B, 1) and pred.dtype == jnp.float32
    print("KERNEL_OK")
</pallas_src>

<mosaic_0001>
module attributes {stable_mosaic.version = 11 : i64} {
  func.func @mmcaf_kernel(%arg0: i32, %arg1: memref<256x128xbf16, #tpu.memory_space<vmem>>, %arg2: memref<7x128xf32, #tpu.memory_space<vmem>>, %arg3: memref<72x256xbf16, #tpu.memory_space<vmem>>, %arg4: memref<24x63xbf16, #tpu.memory_space<vmem>>, %arg5: memref<128x1xf32, #tpu.memory_space<vmem>>, %arg6: memref<1x128xf32, #tpu.memory_space<vmem>>) attributes {dimension_semantics = [#tpu.dimension_semantics<parallel>], iteration_bounds = array<i64: 1>, scalar_prefetch = 0 : i64, scratch_operands = 0 : i64, tpu.core_type = #tpu.core_type<tc>, window_params = [{transform_indices = @transform_0, window_bounds = array<i64: 256, 128>}, {transform_indices = @transform_1, window_bounds = array<i64: 7, 128>}, {pipeline_mode = #tpu.pipeline_mode<synchronous>, transform_indices = @transform_2, window_bounds = array<i64: 72, 256>}, {pipeline_mode = #tpu.pipeline_mode<synchronous>, transform_indices = @transform_3, window_bounds = array<i64: 24, 63>}, {pipeline_mode = #tpu.pipeline_mode<synchronous>, transform_indices = @transform_4, window_bounds = array<i64: 128, 1>}, {transform_indices = @transform_5, window_bounds = array<i64: 1, 128>}]} {
    %c0 = arith.constant 0 : index
    %c0_0 = arith.constant 0 : index
    %0 = vector.load %arg2[%c0, %c0_0] : memref<7x128xf32, #tpu.memory_space<vmem>>, vector<7x128xf32>
    %1 = vector.shape_cast %0 : vector<7x128xf32> to vector<7x1x128xf32>
    %2 = tpu.iota {dimensions = array<i32: 1>} : vector<1x12x1xi32>
    %3 = arith.sitofp %2 : vector<1x12x1xi32> to vector<1x12x1xf32>
    %cst = arith.constant 4.000000e-01 : f32
    %4 = vector.broadcast %cst : f32 to vector<1x12x1xf32>
    %5 = arith.mulf %3, %4 : vector<1x12x1xf32>
    %cst_1 = arith.constant 2.200000e+00 : f32
    %6 = vector.broadcast %cst_1 : f32 to vector<1x12x1xf32>
    %7 = arith.subf %5, %6 : vector<1x12x1xf32>
    %8 = vector.extract_strided_slice %7 {offsets = [0, 0, 0], sizes = [1, 11, 1], strides = [1, 1, 1]} : vector<1x12x1xf32> to vector<1x11x1xf32>
    %9 = vector.broadcast %1 : vector<7x1x128xf32> to vector<7x11x128xf32>
    %10 = vector.broadcast %8 : vector<1x11x1xf32> to vector<7x11x128xf32>
    %11 = arith.cmpf oge, %9, %10 : vector<7x11x128xf32>
    %12 = vector.extract_strided_slice %7 {offsets = [0, 1, 0], sizes = [1, 11, 1], strides = [1, 1, 1]} : vector<1x12x1xf32> to vector<1x11x1xf32>
    %13 = vector.broadcast %1 : vector<7x1x128xf32> to vector<7x11x128xf32>
    %14 = vector.broadcast %12 : vector<1x11x1xf32> to vector<7x11x128xf32>
    %15 = arith.cmpf olt, %13, %14 : vector<7x11x128xf32>
    %16 = arith.andi %11, %15 : vector<7x11x128xi1>
    %17 = arith.extui %16 : vector<7x11x128xi1> to vector<7x11x128xi32>
    %18 = arith.sitofp %17 : vector<7x11x128xi32> to vector<7x11x128xf32>
    %19 = vector.extract_strided_slice %7 {offsets = [0, 0, 0], sizes = [1, 10, 1], strides = [1, 1, 1]} : vector<1x12x1xf32> to vector<1x10x1xf32>
    %20 = vector.broadcast %1 : vector<7x1x128xf32> to vector<7x10x128xf32>
    %21 = vector.broadcast %19 : vector<1x10x1xf32> to vector<7x10x128xf32>
    %22 = arith.subf %20, %21 : vector<7x10x128xf32>
    %cst_2 = arith.constant 2.500000e+00 : f32
    %23 = vector.broadcast %cst_2 : f32 to vector<7x10x128xf32>
    %24 = arith.mulf %22, %23 : vector<7x10x128xf32>
    %25 = vector.extract_strided_slice %18 {offsets = [0, 0, 0], sizes = [7, 10, 128], strides = [1, 1, 1]} : vector<7x11x128xf32> to vector<7x10x128xf32>
    %26 = arith.mulf %24, %25 : vector<7x10x128xf32>
    %27 = vector.extract_strided_slice %7 {offsets = [0, 2, 0], sizes = [1, 10, 1], strides = [1, 1, 1]} : vector<1x12x1xf32> to vector<1x10x1xf32>
    %28 = vector.broadcast %27 : vector<1x10x1xf32> to vector<7x10x128xf32>
    %29 = vector.broadcast %1 : vector<7x1x128xf32> to vector<7x10x128xf32>
    %30 = arith.subf %28, %29 : vector<7x10x128xf32>
    %cst_3 = arith.constant 2.500000e+00 : f32
    %31 = vector.broadcast %cst_3 : f32 to vector<7x10x128xf32>
    %32 = arith.mulf %30, %31 : vector<7x10x128xf32>
    %33 = vector.extract_strided_slice %18 {offsets = [0, 1, 0], sizes = [7, 10, 128], strides = [1, 1, 1]} : vector<7x11x128xf32> to vector<7x10x128xf32>
    %34 = arith.mulf %32, %33 : vector<7x10x128xf32>
    %35 = arith.addf %26, %34 : vector<7x10x128xf32>
    %36 = vector.extract_strided_slice %7 {offsets = [0, 0, 0], sizes = [1, 9, 1], strides = [1, 1, 1]} : vector<1x12x1xf32> to vector<1x9x1xf32>
    %37 = vector.broadcast %1 : vector<7x1x128xf32> to vector<7x9x128xf32>
    %38 = vector.broadcast %36 : vector<1x9x1xf32> to vector<7x9x128xf32>
    %39 = arith.subf %37, %38 : vector<7x9x128xf32>
    %cst_4 = arith.constant 1.250000e+00 : f32
    %40 = vector.broadcast %cst_4 : f32 to vector<7x9x128xf32>
    %41 = arith.mulf %39, %40 : vector<7x9x128xf32>
    %42 = vector.extract_strided_slice %35 {offsets = [0, 0, 0], sizes = [7, 9, 128], strides = [1, 1, 1]} : vector<7x10x128xf32> to vector<7x9x128xf32>
    %43 = arith.mulf %41, %42 : vector<7x9x128xf32>
    %44 = vector.extract_strided_slice %7 {offsets = [0, 3, 0], sizes = [1, 9, 1], strides = [1, 1, 1]} : vector<1x12x1xf32> to vector<1x9x1xf32>
    %45 = vector.broadcast %44 : vector<1x9x1xf32> to vector<7x9x128xf32>
    %46 = vector.broadcast %1 : vector<7x1x128xf32> to vector<7x9x128xf32>
    %47 = arith.subf %45, %46 : vector<7x9x128xf32>
    %cst_5 = arith.constant 1.250000e+00 : f32
    %48 = vector.broadcast %cst_5 : f32 to vector<7x9x128xf32>
    %49 = arith.mulf %47, %48 : vector<7x9x128xf32>
    %50 = vector.extract_strided_slice %35 {offsets = [0, 1, 0], sizes = [7, 9, 128], strides = [1, 1, 1]} : vector<7x10x128xf32> to vector<7x9x128xf32>
    %51 = arith.mulf %49, %50 : vector<7x9x128xf32>
    %52 = arith.addf %43, %51 : vector<7x9x128xf32>
    %53 = vector.extract_strided_slice %7 {offsets = [0, 0, 0], sizes = [1, 8, 1], strides = [1, 1, 1]} : vector<1x12x1xf32> to vector<1x8x1xf32>
    %54 = vector.broadcast %1 : vector<7x1x128xf32> to vector<7x8x128xf32>
    %55 = vector.broadcast %53 : vector<1x8x1xf32> to vector<7x8x128xf32>
    %56 = arith.subf %54, %55 : vector<7x8x128xf32>
    %cst_6 = arith.constant 0.833333313 : f32
    %57 = vector.broadcast %cst_6 : f32 to vector<7x8x128xf32>
    %58 = arith.mulf %56, %57 : vector<7x8x128xf32>
    %59 = vector.extract_strided_slice %52 {offsets = [0, 0, 0], sizes = [7, 8, 128], strides = [1, 1, 1]} : vector<7x9x128xf32> to vector<7x8x128xf32>
    %60 = arith.mulf %58, %59 : vector<7x8x128xf32>
    %61 = vector.extract_strided_slice %7 {offsets = [0, 4, 0], sizes = [1, 8, 1], strides = [1, 1, 1]} : vector<1x12x1xf32> to vector<1x8x1xf32>
    %62 = vector.broadcast %61 : vector<1x8x1xf32> to vector<7x8x128xf32>
    %63 = vector.broadcast %1 : vector<7x1x128xf32> to vector<7x8x128xf32>
    %64 = arith.subf %62, %63 : vector<7x8x128xf32>
    %cst_7 = arith.constant 0.833333313 : f32
    %65 = vector.broadcast %cst_7 : f32 to vector<7x8x128xf32>
    %66 = arith.mulf %64, %65 : vector<7x8x128xf32>
    %67 = vector.extract_strided_slice %52 {offsets = [0, 1, 0], sizes = [7, 8, 128], strides = [1, 1, 1]} : vector<7x9x128xf32> to vector<7x8x128xf32>
    %68 = arith.mulf %66, %67 : vector<7x8x128xf32>
    %69 = arith.addf %60, %68 : vector<7x8x128xf32>
    %cst_8 = arith.constant 5.000000e-01 : f32
    %70 = vector.broadcast %cst_8 : f32 to vector<7x128xf32>
    %71 = arith.mulf %70, %0 : vector<7x128xf32>
    %72 = math.tanh %71 : vector<7x128xf32>
    %cst_9 = arith.constant 1.000000e+00 : f32
    %73 = vector.broadcast %cst_9 : f32 to vector<7x128xf32>
    %74 = arith.addf %72, %73 : vector<7x128xf32>
    %cst_10 = arith.constant 5.000000e-01 : f32
    %75 = vector.broadcast %cst_10 : f32 to vector<7x128xf32>
    %76 = arith.mulf %75, %74 : vector<7x128xf32>
    %77 = arith.mulf %0, %76 : vector<7x128xf32>
    %78 = vector.shape_cast %69 : vector<7x8x128xf32> to vector<56x128xf32>
    %79 = tpu.concatenate %78, %77 in 0 : vector<56x128xf32>, vector<7x128xf32> -> vector<63x128xf32>
    %c0_11 = arith.constant 0 : index
    %c0_12 = arith.constant 0 : index
    %80 = vector.load %arg4[%c0_11, %c0_12] : memref<24x63xbf16, #tpu.memory_space<vmem>>, vector<24x63xbf16>
    %81 = arith.truncf %79 : vector<63x128xf32> to vector<63x128xbf16>
    %cst_13 = arith.constant dense<0.000000e+00> : vector<24x128xf32>
    %82 = tpu.matmul %80, %81, %cst_13 {dimension_numbers = #tpu.dot_dimension_numbers<[1], [0], [0], [1], [0, 0, 1, 1], [], []>} : vector<24x63xbf16>, vector<63x128xbf16>, vector<24x128xf32> -> vector<24x128xf32>
    %c0_14 = arith.constant 0 : index
    %c0_15 = arith.constant 0 : index
    %83 = vector.load %arg3[%c0_14, %c0_15] : memref<72x256xbf16, #tpu.memory_space<vmem>>, vector<72x256xbf16>
    %c0_16 = arith.constant 0 : index
    %c0_17 = arith.constant 0 : index
    %84 = vector.load %arg1[%c0_16, %c0_17] : memref<256x128xbf16, #tpu.memory_space<vmem>>, vector<256x128xbf16>
    %cst_18 = arith.constant dense<0.000000e+00> : vector<72x128xf32>
    %85 = tpu.matmul %83, %84, %cst_18 {dimension_numbers = #tpu.dot_dimension_numbers<[1], [0], [0], [1], [0, 0, 1, 1], [], []>} : vector<72x256xbf16>, vector<256x128xbf16>, vector<72x128xf32> -> vector<72x128xf32>
    %c0_19 = arith.constant 0 : index
    %c0_20 = arith.constant 0 : index
    %86 = vector.load %arg5[%c0_19, %c0_20] : memref<128x1xf32, #tpu.memory_space<vmem>>, vector<72x1xf32>
    %87 = vector.broadcast %86 : vector<72x1xf32> to vector<72x128xf32>
    %88 = arith.addf %85, %87 : vector<72x128xf32>
    %cst_21 = arith.constant 0.000000e+00 : f32
    %89 = vector.broadcast %cst_21 : f32 to vector<72x128xf32>
    %90 = arith.maximumf %88, %89 : vector<72x128xf32>
    %91 = vector.extract_strided_slice %90 {offsets = [0, 0], sizes = [24, 128], strides = [1, 1]} : vector<72x128xf32> to vector<24x128xf32>
    %92 = vector.extract_strided_slice %90 {offsets = [24, 0], sizes = [24, 128], strides = [1, 1]} : vector<72x128xf32> to vector<24x128xf32>
    %93 = vector.extract_strided_slice %90 {offsets = [48, 0], sizes = [24, 128], strides = [1, 1]} : vector<72x128xf32> to vector<24x128xf32>
    %94 = arith.mulf %82, %91 : vector<24x128xf32>
    %cst_22 = arith.constant dense<0.000000e+00> : vector<128xf32>
    %95 = vector.multi_reduction <add>, %94, %cst_22 [0] : vector<24x128xf32> to vector<128xf32>
    %96 = vector.shape_cast %95 : vector<128xf32> to vector<1x128xf32>
    %cst_23 = arith.constant 0.204124153 : f32
    %97 = vector.broadcast %cst_23 : f32 to vector<1x128xf32>
    %98 = arith.mulf %96, %97 : vector<1x128xf32>
    %99 = arith.mulf %82, %92 : vector<24x128xf32>
    %cst_24 = arith.constant dense<0.000000e+00> : vector<128xf32>
    %100 = vector.multi_reduction <add>, %99, %cst_24 [0] : vector<24x128xf32> to vector<128xf32>
    %101 = vector.shape_cast %100 : vector<128xf32> to vector<1x128xf32>
    %cst_25 = arith.constant 0.204124153 : f32
    %102 = vector.broadcast %cst_25 : f32 to vector<1x128xf32>
    %103 = arith.mulf %101, %102 : vector<1x128xf32>
    %104 = arith.mulf %82, %93 : vector<24x128xf32>
    %cst_26 = arith.constant dense<0.000000e+00> : vector<128xf32>
    %105 = vector.multi_reduction <add>, %104, %cst_26 [0] : vector<24x128xf32> to vector<128xf32>
    %106 = vector.shape_cast %105 : vector<128xf32> to vector<1x128xf32>
    %cst_27 = arith.constant 0.204124153 : f32
    %107 = vector.broadcast %cst_27 : f32 to vector<1x128xf32>
    %108 = arith.mulf %106, %107 : vector<1x128xf32>
    %109 = arith.maximumf %103, %108 : vector<1x128xf32>
    %110 = arith.maximumf %98, %109 : vector<1x128xf32>
    %111 = arith.subf %98, %110 : vector<1x128xf32>
    %112 = math.exp %111 : vector<1x128xf32>
    %113 = arith.subf %103, %110 : vector<1x128xf32>
    %114 = math.exp %113 : vector<1x128xf32>
    %115 = arith.subf %108, %110 : vector<1x128xf32>
    %116 = math.exp %115 : vector<1x128xf32>
    %117 = arith.addf %112, %114 : vector<1x128xf32>
    %118 = arith.addf %117, %116 : vector<1x128xf32>
    %119 = tpu.reciprocal %118 {approx = true} : vector<1x128xf32> -> vector<1x128xf32>
    %120 = vector.broadcast %112 : vector<1x128xf32> to vector<24x128xf32>
    %121 = arith.mulf %120, %91 : vector<24x128xf32>
    %122 = vector.broadcast %114 : vector<1x128xf32> to vector<24x128xf32>
    %123 = arith.mulf %122, %92 : vector<24x128xf32>
    %124 = arith.addf %121, %123 : vector<24x128xf32>
    %125 = vector.broadcast %116 : vector<1x128xf32> to vector<24x128xf32>
    %126 = arith.mulf %125, %93 : vector<24x128xf32>
    %127 = arith.addf %124, %126 : vector<24x128xf32>
    %128 = vector.broadcast %119 : vector<1x128xf32> to vector<24x128xf32>
    %129 = arith.mulf %127, %128 : vector<24x128xf32>
    %c72 = arith.constant 72 : index
    %c0_28 = arith.constant 0 : index
    %130 = vector.load %arg5[%c72, %c0_28] : memref<128x1xf32, #tpu.memory_space<vmem>>, vector<24x1xf32>
    %c96 = arith.constant 96 : index
    %c0_29 = arith.constant 0 : index
    %131 = vector.load %arg5[%c96, %c0_29] : memref<128x1xf32, #tpu.memory_space<vmem>>, vector<24x1xf32>
    %132 = vector.broadcast %130 : vector<24x1xf32> to vector<24x128xf32>
    %133 = arith.mulf %129, %132 : vector<24x128xf32>
    %cst_30 = arith.constant dense<0.000000e+00> : vector<128xf32>
    %134 = vector.multi_reduction <add>, %133, %cst_30 [0] : vector<24x128xf32> to vector<128xf32>
    %135 = vector.shape_cast %134 : vector<128xf32> to vector<1x128xf32>
    %136 = vector.broadcast %131 : vector<24x1xf32> to vector<24x128xf32>
    %137 = arith.mulf %82, %136 : vector<24x128xf32>
    %cst_31 = arith.constant dense<0.000000e+00> : vector<128xf32>
    %138 = vector.multi_reduction <add>, %137, %cst_31 [0] : vector<24x128xf32> to vector<128xf32>
    %139 = vector.shape_cast %138 : vector<128xf32> to vector<1x128xf32>
    %140 = arith.addf %135, %139 : vector<1x128xf32>
    %c120 = arith.constant 120 : index
    %c0_32 = arith.constant 0 : index
    %141 = vector.load %arg5[%c120, %c0_32] : memref<128x1xf32, #tpu.memory_space<vmem>>, vector<1x1xf32>
    %142 = vector.broadcast %141 : vector<1x1xf32> to vector<1x128xf32>
    %143 = arith.addf %140, %142 : vector<1x128xf32>
    %c0_33 = arith.constant 0 : index
    %c0_34 = arith.constant 0 : index
    %144 = vector.load %arg6[%c0_33, %c0_34] : memref<1x128xf32, #tpu.memory_space<vmem>>, vector<1x128xf32>
    tpu.vector_store %arg6[%c0_33, %c0_34], %143 {strides = array<i32>} : memref<1x128xf32, #tpu.memory_space<vmem>>, vector<1x128xf32>,
    return
  }
  func.func @transform_0(%arg0: i32) -> (i32, i32) {
    %c0_i32 = arith.constant 0 : i32
    %c0_i32_0 = arith.constant 0 : i32
    return %c0_i32, %arg0 : i32, i32
  }
  func.func @transform_1(%arg0: i32) -> (i32, i32) {
    %c0_i32 = arith.constant 0 : i32
    %c0_i32_0 = arith.constant 0 : i32
    return %c0_i32, %arg0 : i32, i32
  }
  func.func @transform_2(%arg0: i32) -> (i32, i32) {
    %c0_i32 = arith.constant 0 : i32
    %c0_i32_0 = arith.constant 0 : i32
    %c0_i32_1 = arith.constant 0 : i32
    return %c0_i32, %c0_i32_0 : i32, i32
  }
  func.func @transform_3(%arg0: i32) -> (i32, i32) {
    %c0_i32 = arith.constant 0 : i32
    %c0_i32_0 = arith.constant 0 : i32
    %c0_i32_1 = arith.constant 0 : i32
    return %c0_i32, %c0_i32_0 : i32, i32
  }
  func.func @transform_4(%arg0: i32) -> (i32, i32) {
    %c0_i32 = arith.constant 0 : i32
    %c0_i32_0 = arith.constant 0 : i32
    %c0_i32_1 = arith.constant 0 : i32
    return %c0_i32, %c0_i32_0 : i32, i32
  }
  func.func @transform_5(%arg0: i32) -> (i32, i32) {
    %c0_i32 = arith.constant 0 : i32
    %c0_i32_0 = arith.constant 0 : i32
    return %c0_i32, %arg0 : i32, i32
  }
}

</mosaic_0001>

<llo_original>
// kernel: mmcaf_forward.1
$region0: #{mmcaf_forward.1}
  #allocation0 [shape = 'u32[]', space=smem, size = 0x4, offset = 0x4, fixed_abs, tag = 'smem constant byte address 0x4 - core index']
  #allocation1 [shape = 'u32[144,128]{1,0:T(1,128)}', space=vmem, size = 0x12000, scoped, tag = 'internal scratch']
  %s0 = inlined_call_operand.vmem [shape: bf16[256,128], index: 0, kind: input, shape index: {}]
  %s1 = inlined_call_operand.vmem [shape: f32[7,128], index: 1, kind: input, shape index: {}]
  %s2 = inlined_call_operand.vmem [shape: bf16[72,256], index: 2, kind: input, shape index: {}]
  %s3 = inlined_call_operand.vmem [shape: bf16[24,63], index: 3, kind: input, shape index: {}]
  %s4 = inlined_call_operand.vmem [shape: f32[128,1], index: 4, kind: input, shape index: {}]
  %s5 = inlined_call_operand.vmem [shape: f32[1,128], index: 5, kind: output, shape index: {}]
  %s6 = sld [smem:[#allocation0]]
  $region30: #{mmcaf_forward.1} parent=0
    _
  %s8 = ssub.s32 1, %s6
  %s9 = scalar_select 0, %s8, %s6
  // Predicated region
  $region2: #{mmcaf_forward.1} parent=0 // pred_check
    _
  $region3: #{mmcaf_forward.1} parent=0 // pred_check_branch
    %11 = sbr.rel (0) target = $region5
  $region4: #{mmcaf_forward.1} parent=0 // pred_region
    _
  $region5: #{mmcaf_forward.1} parent=0 // pred_fallthru
    _
  // Predicated region
  $region6: #{mmcaf_forward.1} parent=0 // pred_check
    _
  $region7: #{mmcaf_forward.1} parent=0 // pred_check_branch
    %13 = sbr.rel (0) target = $region9
  $region8: #{mmcaf_forward.1} parent=0 // pred_region
    _
  $region9: #{mmcaf_forward.1} parent=0 // pred_fallthru
    _
  // Predicated region
  $region10: #{mmcaf_forward.1} parent=0 // pred_check
    _
  $region11: #{mmcaf_forward.1} parent=0 // pred_check_branch
    %15 = sbr.rel (0) target = $region13
  $region12: #{mmcaf_forward.1} parent=0 // pred_region
    _
  $region13: #{mmcaf_forward.1} parent=0 // pred_fallthru
    _
  // Predicated region
  $region14: #{mmcaf_forward.1} parent=0 // pred_check
    _
  $region15: #{mmcaf_forward.1} parent=0 // pred_check_branch
    %17 = sbr.rel (0) target = $region17
  $region16: #{mmcaf_forward.1} parent=0 // pred_region
    _
  $region17: #{mmcaf_forward.1} parent=0 // pred_fallthru
    _
  // Predicated region
  $region18: #{mmcaf_forward.1} parent=0 // pred_check
    _
  $region19: #{mmcaf_forward.1} parent=0 // pred_check_branch
    %19 = sbr.rel (0) target = $region21
  $region20: #{mmcaf_forward.1} parent=0 // pred_region
    _
  $region21: #{mmcaf_forward.1} parent=0 // pred_fallthru
    _
  %v21 = vld [vmem:[%s1] sm:$0x7f]
  %v23 = vcombine.high %v21, %v21
  %v25 = vunpack.c.l.s4 1966171168
  %v26 = vunpack.c.0.s8 %v25
  %v27 = vlaneseq
  %v28 = vshrl.u32 %v27, 7
  %v29 = vsub.s32 %v26, %v28
  %v30 = vrot.slane %v21, %v29
  %v32 = vunpack.c.l.s4 1966171168
  %v33 = vunpack.c.0.s8 %v32
  %v34 = vlaneseq
  %v35 = vshrl.u32 %v34, 7
  %v36 = vsub.s32 %v33, %v35
  %v37 = vrot.slane %v23, %v36
  %v38 = vcombine.high %v30, %v30
  %v39 = vcombine.high %v37, %v37
  %v41 = vunpack.c.l.s4 1966171168
  %v42 = vunpack.c.0.s8 %v41
  %v43 = vlaneseq
  %v44 = vshrl.u32 %v43, 7
  %v45 = vsub.s32 %v42, %v44
  %v46 = vrot.slane %v30, %v45
  %v48 = vunpack.c.l.s4 1966171168
  %v49 = vunpack.c.0.s8 %v48
  %v50 = vlaneseq
  %v51 = vshrl.u32 %v50, 7
  %v52 = vsub.s32 %v49, %v51
  %v53 = vrot.slane %v37, %v52
  %v55 = vunpack.c.l.s4 1966171168
  %v56 = vunpack.c.0.s8 %v55
  %v57 = vlaneseq
  %v58 = vshrl.u32 %v57, 7
  %v59 = vsub.s32 %v56, %v58
  %v60 = vrot.slane %v38, %v59
  %v62 = vunpack.c.l.s4 1966171168
  %v63 = vunpack.c.0.s8 %v62
  %v64 = vlaneseq
  %v65 = vshrl.u32 %v64, 7
  %v66 = vsub.s32 %v63, %v65
  %v67 = vrot.slane %v39, %v66
  %v68 = vcombine.high %v46, %v46
  %v69 = vcombine.high %v53, %v53
  %v70 = vcombine.high %v60, %v60
  %v71 = vlaneseq
  %v72 = vshrl.u32 %v71, 7
  %v73 = vadd.s32 %v72, 8
  %v74 = vcvt.s32.f32 %v72
  %v75 = vcvt.s32.f32 %v73
  %v76 = vmul.f32 %v74, 0.4
  %v77 = vmul.f32 %v75, 0.4
  %v78 = vsub.f32 %v76, 2.2
  %v79 = vsub.f32 %v77, 2.2
  %v80 = vlaneseq
  %v81 = vshrl.u32 %v80, 7
  %v82 = vsub.s32 0, %v81
  %v83 = vrot.slane %v46, %v82
  %v84 = vlaneseq
  %v85 = vshrl.u32 %v84, 7
  %v86 = vsub.s32 0, %v85
  %v87 = vrot.slane %v60, %v86
  %v88 = vlaneseq
  %v89 = vshrl.u32 %v88, 7
  %v90 = vsub.s32 0, %v89
  %v91 = vrot.slane %v68, %v90
  %v92 = vlaneseq
  %v93 = vshrl.u32 %v92, 7
  %v94 = vsub.s32 0, %v93
  %v95 = vrot.slane %v70, %v94
  %v96 = vlaneseq
  %v97 = vshrl.u32 %v96, 7
  %v98 = vsub.s32 0, %v97
  %v99 = vrot.slane %v53, %v98
  %v100 = vlaneseq
  %v101 = vshrl.u32 %v100, 7
  %v102 = vsub.s32 0, %v101
  %v103 = vrot.slane %v67, %v102
  %v104 = vlaneseq
  %v105 = vshrl.u32 %v104, 7
  %v106 = vsub.s32 0, %v105
  %v107 = vrot.slane %v69, %v106
  %vm115 = vcmp.ge.f32.partialorder %v83, %v78
  %vm116 = vcmp.ge.f32.partialorder %v83, %v79
  %vm117 = vcmp.ge.f32.partialorder %v87, %v78
  %vm118 = vcmp.ge.f32.partialorder %v87, %v79
  %vm119 = vcmp.ge.f32.partialorder %v91, %v78
  %vm120 = vcmp.ge.f32.partialorder %v91, %v79
  %vm121 = vcmp.ge.f32.partialorder %v95, %v78
  %vm122 = vcmp.ge.f32.partialorder %v95, %v79
  %vm123 = vcmp.ge.f32.partialorder %v99, %v78
  %vm124 = vcmp.ge.f32.partialorder %v99, %v79
  %vm125 = vcmp.ge.f32.partialorder %v103, %v78
  %vm126 = vcmp.ge.f32.partialorder %v103, %v79
  %vm127 = vcmp.ge.f32.partialorder %v107, %v78
  %vm128 = vcmp.ge.f32.partialorder %v107, %v79
  %vm129 = vcmp.lt.f32.partialorder %v83, %v78
  %vm130 = vcmp.lt.f32.partialorder %v83, %v79
  %vm131 = vcmp.lt.f32.partialorder %v87, %v78
  %vm132 = vcmp.lt.f32.partialorder %v87, %v79
  %vm133 = vcmp.lt.f32.partialorder %v91, %v78
  %vm134 = vcmp.lt.f32.partialorder %v91, %v79
  %vm135 = vcmp.lt.f32.partialorder %v95, %v78
  %vm136 = vcmp.lt.f32.partialorder %v95, %v79
  %vm137 = vcmp.lt.f32.partialorder %v99, %v78
  %vm138 = vcmp.lt.f32.partialorder %v99, %v79
  %vm139 = vcmp.lt.f32.partialorder %v103, %v78
  %vm140 = vcmp.lt.f32.partialorder %v103, %v79
  %vm141 = vcmp.lt.f32.partialorder %v107, %v78
  %vm142 = vcmp.lt.f32.partialorder %v107, %v79
  %v143 = vsel %vm129, 1, 0
  %v144 = vsel %vm130, 1, 0
  %v145 = vsel %vm131, 1, 0
  %v146 = vsel %vm132, 1, 0
  %v147 = vsel %vm133, 1, 0
  %v148 = vsel %vm134, 1, 0
  %v149 = vsel %vm135, 1, 0
  %v150 = vsel %vm136, 1, 0
  %v151 = vsel %vm137, 1, 0
  %v152 = vsel %vm138, 1, 0
  %v153 = vsel %vm139, 1, 0
  %v154 = vsel %vm140, 1, 0
  %v155 = vsel %vm141, 1, 0
  %v156 = vsel %vm142, 1, 0
  %vm157 = vcmask 1046528
  %v158 = vrot.slane %v143, 1
  %v159 = vrot.slane %v144, 1
  %v160 = vsel %vm157, %v158, %v159
  %v161 = vrot.slane %v145, 1
  %v162 = vrot.slane %v146, 1
  %v163 = vsel %vm157, %v161, %v162
  %v164 = vrot.slane %v147, 1
  %v165 = vrot.slane %v148, 1
  %v166 = vsel %vm157, %v164, %v165
  %v167 = vrot.slane %v149, 1
  %v168 = vrot.slane %v150, 1
  %v169 = vsel %vm157, %v167, %v168
  %v170 = vrot.slane %v151, 1
  %v171 = vrot.slane %v152, 1
  %v172 = vsel %vm157, %v170, %v171
  %v173 = vrot.slane %v153, 1
  %v174 = vrot.slane %v154, 1
  %v175 = vsel %vm157, %v173, %v174
  %v176 = vrot.slane %v155, 1
  %v177 = vrot.slane %v156, 1
  %v178 = vsel %vm157, %v176, %v177
  %vm179 = vcmp.ne.s32.totalorder %v160, 0
  %vm180 = vcmp.ne.s32.totalorder %v159, 0
  %vm181 = vcmp.ne.s32.totalorder %v163, 0
  %vm182 = vcmp.ne.s32.totalorder %v162, 0
  %vm183 = vcmp.ne.s32.totalorder %v166, 0
  %vm184 = vcmp.ne.s32.totalorder %v165, 0
  %vm185 = vcmp.ne.s32.totalorder %v169, 0
  %vm186 = vcmp.ne.s32.totalorder %v168, 0
  %vm187 = vcmp.ne.s32.totalorder %v172, 0
  %vm188 = vcmp.ne.s32.totalorder %v171, 0
  %vm189 = vcmp.ne.s32.totalorder %v175, 0
  %vm190 = vcmp.ne.s32.totalorder %v174, 0
  %vm191 = vcmp.ne.s32.totalorder %v178, 0
  %vm192 = vcmp.ne.s32.totalorder %v177, 0
  %vm193 = vmand %vm115, %vm179
  %vm194 = vmand %vm116, %vm180
  %vm195 = vmand %vm117, %vm181
  %vm196 = vmand %vm118, %vm182
  %vm197 = vmand %vm119, %vm183
  %vm198 = vmand %vm120, %vm184
  %vm199 = vmand %vm121, %vm185
  %vm200 = vmand %vm122, %vm186
  %vm201 = vmand %vm123, %vm187
  %vm202 = vmand %vm124, %vm188
  %vm203 = vmand %vm125, %vm189
  %vm204 = vmand %vm126, %vm190
  %vm205 = vmand %vm127, %vm191
  %vm206 = vmand %vm128, %vm192
  %v207 = vsel %vm193, 1, 0
  %v208 = vsel %vm194, 1, 0
  %v209 = vsel %vm195, 1, 0
  %v210 = vsel %vm196, 1, 0
  %v211 = vsel %vm197, 1, 0
  %v212 = vsel %vm198, 1, 0
  %v213 = vsel %vm199, 1, 0
  %v214 = vsel %vm200, 1, 0
  %v215 = vsel %vm201, 1, 0
  %v216 = vsel %vm202, 1, 0
  %v217 = vsel %vm203, 1, 0
  %v218 = vsel %vm204, 1, 0
  %v219 = vsel %vm205, 1, 0
  %v220 = vsel %vm206, 1, 0
  %v221 = vcvt.s32.f32 %v207
  %v222 = vcvt.s32.f32 %v208
  %v223 = vcvt.s32.f32 %v209
  %v224 = vcvt.s32.f32 %v210
  %v225 = vcvt.s32.f32 %v211
  %v226 = vcvt.s32.f32 %v212
  %v227 = vcvt.s32.f32 %v213
  %v228 = vcvt.s32.f32 %v214
  %v229 = vcvt.s32.f32 %v215
  %v230 = vcvt.s32.f32 %v216
  %v231 = vcvt.s32.f32 %v217
  %v232 = vcvt.s32.f32 %v218
  %v233 = vcvt.s32.f32 %v219
  %v234 = vcvt.s32.f32 %v220
  %v235 = vsub.f32 %v83, %v78
  %v236 = vsub.f32 %v83, %v79
  %v237 = vsub.f32 %v87, %v78
  %v238 = vsub.f32 %v87, %v79
  %v239 = vsub.f32 %v91, %v78
  %v240 = vsub.f32 %v91, %v79
  %v241 = vsub.f32 %v95, %v78
  %v242 = vsub.f32 %v95, %v79
  %v243 = vsub.f32 %v99, %v78
  %v244 = vsub.f32 %v99, %v79
  %v245 = vsub.f32 %v103, %v78
  %v246 = vsub.f32 %v103, %v79
  %v247 = vsub.f32 %v107, %v78
  %v248 = vsub.f32 %v107, %v79
  %v249 = vmul.f32 %v235, 2.5
  %v250 = vmul.f32 %v236, 2.5
  %v251 = vmul.f32 %v237, 2.5
  %v252 = vmul.f32 %v238, 2.5
  %v253 = vmul.f32 %v239, 2.5
  %v254 = vmul.f32 %v240, 2.5
  %v255 = vmul.f32 %v241, 2.5
  %v256 = vmul.f32 %v242, 2.5
  %v257 = vmul.f32 %v243, 2.5
  %v258 = vmul.f32 %v244, 2.5
  %v259 = vmul.f32 %v245, 2.5
  %v260 = vmul.f32 %v246, 2.5
  %v261 = vmul.f32 %v247, 2.5
  %v262 = vmul.f32 %v248, 2.5
  %v263 = vmul.f32 %v249, %v221
  %v264 = vmul.f32 %v250, %v222
  %v265 = vmul.f32 %v251, %v223
  %v266 = vmul.f32 %v252, %v224
  %v267 = vmul.f32 %v253, %v225
  %v268 = vmul.f32 %v254, %v226
  %v269 = vmul.f32 %v255, %v227
  %v270 = vmul.f32 %v256, %v228
  %v271 = vmul.f32 %v257, %v229
  %v272 = vmul.f32 %v258, %v230
  %v273 = vmul.f32 %v259, %v231
  %v274 = vmul.f32 %v260, %v232
  %v275 = vmul.f32 %v261, %v233
  %v276 = vmul.f32 %v262, %v234
  %v277 = vsub.f32 %v78, %v83
  %v278 = vsub.f32 %v79, %v83
  %v279 = vsub.f32 %v78, %v87
  %v280 = vsub.f32 %v79, %v87
  %v281 = vsub.f32 %v78, %v91
  %v282 = vsub.f32 %v79, %v91
  %v283 = vsub.f32 %v78, %v95
  %v284 = vsub.f32 %v79, %v95
  %v285 = vsub.f32 %v78, %v99
  %v286 = vsub.f32 %v79, %v99
  %v287 = vsub.f32 %v78, %v103
  %v288 = vsub.f32 %v79, %v103
  %v289 = vsub.f32 %v78, %v107
  %v290 = vsub.f32 %v79, %v107
  %v291 = vmul.f32 %v277, 2.5
  %v292 = vmul.f32 %v278, 2.5
  %v293 = vmul.f32 %v279, 2.5
  %v294 = vmul.f32 %v280, 2.5
  %v295 = vmul.f32 %v281, 2.5
  %v296 = vmul.f32 %v282, 2.5
  %v297 = vmul.f32 %v283, 2.5
  %v298 = vmul.f32 %v284, 2.5
  %v299 = vmul.f32 %v285, 2.5
  %v300 = vmul.f32 %v286, 2.5
  %v301 = vmul.f32 %v287, 2.5
  %v302 = vmul.f32 %v288, 2.5
  %v303 = vmul.f32 %v289, 2.5
  %v304 = vmul.f32 %v290, 2.5
  %vm319 = vcmask 1040384
  %v320 = vrot.slane %v221, 7
  %v321 = vrot.slane %v222, 7
  %v322 = vsel %vm319, %v320, %v321
  %v323 = vrot.slane %v223, 7
  %v324 = vrot.slane %v224, 7
  %v325 = vsel %vm319, %v323, %v324
  %v326 = vrot.slane %v225, 7
  %v327 = vrot.slane %v226, 7
  %v328 = vsel %vm319, %v326, %v327
  %v329 = vrot.slane %v227, 7
  %v330 = vrot.slane %v228, 7
  %v331 = vsel %vm319, %v329, %v330
  %v332 = vrot.slane %v229, 7
  %v333 = vrot.slane %v230, 7
  %v334 = vsel %vm319, %v332, %v333
  %v335 = vrot.slane %v231, 7
  %v336 = vrot.slane %v232, 7
  %v337 = vsel %vm319, %v335, %v336
  %v338 = vrot.slane %v233, 7
  %v339 = vrot.slane %v234, 7
  %v340 = vsel %vm319, %v338, %v339
  %v355 = vmul.f32 %v291, %v320
  %v356 = vmul.f32 %v292, %v322
  %v357 = vmul.f32 %v293, %v323
  %v358 = vmul.f32 %v294, %v325
  %v359 = vmul.f32 %v295, %v326
  %v360 = vmul.f32 %v296, %v328
  %v361 = vmul.f32 %v297, %v329
  %v362 = vmul.f32 %v298, %v331
  %v363 = vmul.f32 %v299, %v332
  %v364 = vmul.f32 %v300, %v334
  %v365 = vmul.f32 %v301, %v335
  %v366 = vmul.f32 %v302, %v337
  %v367 = vmul.f32 %v303, %v338
  %v368 = vmul.f32 %v304, %v340
  %vm383 = vcmask 1045504
  %v384 = vrot.slane %v355, 2
  %v385 = vrot.slane %v356, 2
  %v386 = vsel %vm383, %v384, %v385
  %v387 = vrot.slane %v357, 2
  %v388 = vrot.slane %v358, 2
  %v389 = vsel %vm383, %v387, %v388
  %v390 = vrot.slane %v359, 2
  %v391 = vrot.slane %v360, 2
  %v392 = vsel %vm383, %v390, %v391
  %v393 = vrot.slane %v361, 2
  %v394 = vrot.slane %v362, 2
  %v395 = vsel %vm383, %v393, %v394
  %v396 = vrot.slane %v363, 2
  %v397 = vrot.slane %v364, 2
  %v398 = vsel %vm383, %v396, %v397
  %v399 = vrot.slane %v365, 2
  %v400 = vrot.slane %v366, 2
  %v401 = vsel %vm383, %v399, %v400
  %v402 = vrot.slane %v367, 2
  %v403 = vrot.slane %v368, 2
  %v404 = vsel %vm383, %v402, %v403
  %v419 = vadd.f32 %v263, %v386
  %v420 = vadd.f32 %v264, %v385
  %v421 = vadd.f32 %v265, %v389
  %v422 = vadd.f32 %v266, %v388
  %v423 = vadd.f32 %v267, %v392
  %v424 = vadd.f32 %v268, %v391
  %v425 = vadd.f32 %v269, %v395
  %v426 = vadd.f32 %v270, %v394
  %v427 = vadd.f32 %v271, %v398
  %v428 = vadd.f32 %v272, %v397
  %v429 = vadd.f32 %v273, %v401
  %v430 = vadd.f32 %v274, %v400
  %v431 = vadd.f32 %v275, %v404
  %v432 = vadd.f32 %v276, %v403
  %v433 = vmul.f32 %v235, 1.25
  %v434 = vmul.f32 %v236, 1.25
  %v435 = vmul.f32 %v237, 1.25
  %v436 = vmul.f32 %v238, 1.25
  %v437 = vmul.f32 %v239, 1.25
  %v438 = vmul.f32 %v240, 1.25
  %v439 = vmul.f32 %v241, 1.25
  %v440 = vmul.f32 %v242, 1.25
  %v441 = vmul.f32 %v243, 1.25
  %v442 = vmul.f32 %v244, 1.25
  %v443 = vmul.f32 %v245, 1.25
  %v444 = vmul.f32 %v246, 1.25
  %v445 = vmul.f32 %v247, 1.25
  %v446 = vmul.f32 %v248, 1.25
  %v447 = vmul.f32 %v433, %v419
  %v448 = vmul.f32 %v434, %v420
  %v449 = vmul.f32 %v435, %v421
  %v450 = vmul.f32 %v436, %v422
  %v451 = vmul.f32 %v437, %v423
  %v452 = vmul.f32 %v438, %v424
  %v453 = vmul.f32 %v439, %v425
  %v454 = vmul.f32 %v440, %v426
  %v455 = vmul.f32 %v441, %v427
  %v456 = vmul.f32 %v442, %v428
  %v457 = vmul.f32 %v443, %v429
  %v458 = vmul.f32 %v444, %v430
  %v459 = vmul.f32 %v445, %v431
  %v460 = vmul.f32 %v446, %v432
  %v461 = vmul.f32 %v277, 1.25
  %v462 = vmul.f32 %v278, 1.25
  %v463 = vmul.f32 %v279, 1.25
  %v464 = vmul.f32 %v280, 1.25
  %v465 = vmul.f32 %v281, 1.25
  %v466 = vmul.f32 %v282, 1.25
  %v467 = vmul.f32 %v283, 1.25
  %v468 = vmul.f32 %v284, 1.25
  %v469 = vmul.f32 %v285, 1.25
  %v470 = vmul.f32 %v286, 1.25
  %v471 = vmul.f32 %v287, 1.25
  %v472 = vmul.f32 %v288, 1.25
  %v473 = vmul.f32 %v289, 1.25
  %v474 = vmul.f32 %v290, 1.25
  %vm489 = vcmask 1041408
  %v490 = vrot.slane %v419, 6
  %v491 = vrot.slane %v420, 6
  %v492 = vsel %vm489, %v490, %v491
  %v493 = vrot.slane %v421, 6
  %v494 = vrot.slane %v422, 6
  %v495 = vsel %vm489, %v493, %v494
  %v496 = vrot.slane %v423, 6
  %v497 = vrot.slane %v424, 6
  %v498 = vsel %vm489, %v496, %v497
  %v499 = vrot.slane %v425, 6
  %v500 = vrot.slane %v426, 6
  %v501 = vsel %vm489, %v499, %v500
  %v502 = vrot.slane %v427, 6
  %v503 = vrot.slane %v428, 6
  %v504 = vsel %vm489, %v502, %v503
  %v505 = vrot.slane %v429, 6
  %v506 = vrot.slane %v430, 6
  %v507 = vsel %vm489, %v505, %v506
  %v508 = vrot.slane %v431, 6
  %v509 = vrot.slane %v432, 6
  %v510 = vsel %vm489, %v508, %v509
  %v525 = vmul.f32 %v461, %v490
  %v526 = vmul.f32 %v462, %v492
  %v527 = vmul.f32 %v463, %v493
  %v528 = vmul.f32 %v464, %v495
  %v529 = vmul.f32 %v465, %v496
  %v530 = vmul.f32 %v466, %v498
  %v531 = vmul.f32 %v467, %v499
  %v532 = vmul.f32 %v468, %v501
  %v533 = vmul.f32 %v469, %v502
  %v534 = vmul.f32 %v470, %v504
  %v535 = vmul.f32 %v471, %v505
  %v536 = vmul.f32 %v472, %v507
  %v537 = vmul.f32 %v473, %v508
  %v538 = vmul.f32 %v474, %v510
  %vm553 = vcmask 1044480
  %v554 = vrot.slane %v525, 3
  %v555 = vrot.slane %v526, 3
  %v556 = vsel %vm553, %v554, %v555
  %v557 = vrot.slane %v527, 3
  %v558 = vrot.slane %v528, 3
  %v559 = vsel %vm553, %v557, %v558
  %v560 = vrot.slane %v529, 3
  %v561 = vrot.slane %v530, 3
  %v562 = vsel %vm553, %v560, %v561
  %v563 = vrot.slane %v531, 3
  %v564 = vrot.slane %v532, 3
  %v565 = vsel %vm553, %v563, %v564
  %v566 = vrot.slane %v533, 3
  %v567 = vrot.slane %v534, 3
  %v568 = vsel %vm553, %v566, %v567
  %v569 = vrot.slane %v535, 3
  %v570 = vrot.slane %v536, 3
  %v571 = vsel %vm553, %v569, %v570
  %v572 = vrot.slane %v537, 3
  %v573 = vrot.slane %v538, 3
  %v574 = vsel %vm553, %v572, %v573
  %v589 = vadd.f32 %v447, %v556
  %v590 = vadd.f32 %v448, %v555
  %v591 = vadd.f32 %v449, %v559
  %v592 = vadd.f32 %v450, %v558
  %v593 = vadd.f32 %v451, %v562
  %v594 = vadd.f32 %v452, %v561
  %v595 = vadd.f32 %v453, %v565
  %v596 = vadd.f32 %v454, %v564
  %v597 = vadd.f32 %v455, %v568
  %v598 = vadd.f32 %v456, %v567
  %v599 = vadd.f32 %v457, %v571
  %v600 = vadd.f32 %v458, %v570
  %v601 = vadd.f32 %v459, %v574
  %v602 = vadd.f32 %v460, %v573
  %v603 = vmul.f32 %v235, 0.8333333
  %v604 = vmul.f32 %v237, 0.8333333
  %v605 = vmul.f32 %v239, 0.8333333
  %v606 = vmul.f32 %v241, 0.8333333
  %v607 = vmul.f32 %v243, 0.8333333
  %v608 = vmul.f32 %v245, 0.8333333
  %v609 = vmul.f32 %v247, 0.8333333
  %v610 = vmul.f32 %v603, %v589
  %v611 = vmul.f32 %v604, %v591
  %v612 = vmul.f32 %v605, %v593
  %v613 = vmul.f32 %v606, %v595
  %v614 = vmul.f32 %v607, %v597
  %v615 = vmul.f32 %v608, %v599
  %v616 = vmul.f32 %v609, %v601
  %v617 = vmul.f32 %v277, 0.8333333
  %v618 = vmul.f32 %v278, 0.8333333
  %v619 = vmul.f32 %v279, 0.8333333
  %v620 = vmul.f32 %v280, 0.8333333
  %v621 = vmul.f32 %v281, 0.8333333
  %v622 = vmul.f32 %v282, 0.8333333
  %v623 = vmul.f32 %v283, 0.8333333
  %v624 = vmul.f32 %v284, 0.8333333
  %v625 = vmul.f32 %v285, 0.8333333
  %v626 = vmul.f32 %v286, 0.8333333
  %v627 = vmul.f32 %v287, 0.8333333
  %v628 = vmul.f32 %v288, 0.8333333
  %v629 = vmul.f32 %v289, 0.8333333
  %v630 = vmul.f32 %v290, 0.8333333
  %vm645 = vcmask 1042432
  %v646 = vrot.slane %v589, 5
  %v647 = vrot.slane %v590, 5
  %v648 = vsel %vm645, %v646, %v647
  %v649 = vrot.slane %v591, 5
  %v650 = vrot.slane %v592, 5
  %v651 = vsel %vm645, %v649, %v650
  %v652 = vrot.slane %v593, 5
  %v653 = vrot.slane %v594, 5
  %v654 = vsel %vm645, %v652, %v653
  %v655 = vrot.slane %v595, 5
  %v656 = vrot.slane %v596, 5
  %v657 = vsel %vm645, %v655, %v656
  %v658 = vrot.slane %v597, 5
  %v659 = vrot.slane %v598, 5
  %v660 = vsel %vm645, %v658, %v659
  %v661 = vrot.slane %v599, 5
  %v662 = vrot.slane %v600, 5
  %v663 = vsel %vm645, %v661, %v662
  %v664 = vrot.slane %v601, 5
  %v665 = vrot.slane %v602, 5
  %v666 = vsel %vm645, %v664, %v665
  %v681 = vmul.f32 %v617, %v646
  %v682 = vmul.f32 %v618, %v648
  %v683 = vmul.f32 %v619, %v649
  %v684 = vmul.f32 %v620, %v651
  %v685 = vmul.f32 %v621, %v652
  %v686 = vmul.f32 %v622, %v654
  %v687 = vmul.f32 %v623, %v655
  %v688 = vmul.f32 %v624, %v657
  %v689 = vmul.f32 %v625, %v658
  %v690 = vmul.f32 %v626, %v660
  %v691 = vmul.f32 %v627, %v661
  %v692 = vmul.f32 %v628, %v663
  %v693 = vmul.f32 %v629, %v664
  %v694 = vmul.f32 %v630, %v666
  %vm709 = vcmask 1043456
  %v710 = vrot.slane %v681, 4
  %v711 = vrot.slane %v682, 4
  %v712 = vsel %vm709, %v710, %v711
  %v713 = vrot.slane %v683, 4
  %v714 = vrot.slane %v684, 4
  %v715 = vsel %vm709, %v713, %v714
  %v716 = vrot.slane %v685, 4
  %v717 = vrot.slane %v686, 4
  %v718 = vsel %vm709, %v716, %v717
  %v719 = vrot.slane %v687, 4
  %v720 = vrot.slane %v688, 4
  %v721 = vsel %vm709, %v719, %v720
  %v722 = vrot.slane %v689, 4
  %v723 = vrot.slane %v690, 4
  %v724 = vsel %vm709, %v722, %v723
  %v725 = vrot.slane %v691, 4
  %v726 = vrot.slane %v692, 4
  %v727 = vsel %vm709, %v725, %v726
  %v728 = vrot.slane %v693, 4
  %v729 = vrot.slane %v694, 4
  %v730 = vsel %vm709, %v728, %v729
  %v738 = vadd.f32 %v610, %v712
  %v739 = vadd.f32 %v611, %v715
  %v740 = vadd.f32 %v612, %v718
  %v741 = vadd.f32 %v613, %v721
  %v742 = vadd.f32 %v614, %v724
  %v743 = vadd.f32 %v615, %v727
  %v744 = vadd.f32 %v616, %v730
  %v745 = vmul.f32 %v21, 0.5
  %v746 = vtanh.pop %v745
  %v747 = vadd.f32 %v746, 1.0
  %v748 = vmul.f32 %v747, 0.5
  %v749 = vmul.f32 %v21, %v748
  %v750 = vld [vmem:[%s3] sm:$0xf]
  %v751 = vld [vmem:[%s3 + $0x4] sm:$0xf]
  %v752 = vld [vmem:[%s3 + $0x8] sm:$0xf]
  %v753 = vpack.c.bf16 %v739, %v738
  %v754 = vpack.c.bf16 %v741, %v740
  %v755 = vpack.c.bf16 %v743, %v742
  %v756 = vpack.c.bf16 %v749, %v744
  %v760 = vunpack.c.l.b16 %v750
  %v761 = vunpack.c.l.b16 %v751
  %v762 = vunpack.c.l.b16 %v752
  %v763 = vpack.c.b16 %v761, %v760
  %v764 = vpack.c.b16 %v762, %v762
  %vm765 = vcmask 515072
  %v767 = vsel %vm765, %v763, 0
  %v770 = vsel %vm765, %v764, 0
  %vm772 = vcmask 1047552
  %v773 = vsel %vm157, 4294967295, 65535
  %v774 = vsel %vm772, %v773, 0
  %v776 = vand.u32 %v756, %v774
  %778 = vmatprep.subr.bf16.mxu0 0
  %779 = vmatpush1.bf16.msra.mxu0 0
  %780 = vmatprep.subr.bf16.mxu0 0
  %781 = vmatpush1.bf16.msra.mxu0 0
  %782 = vmatprep.subr.bf16.mxu0 0
  %783 = vmatpush1.bf16.msra.mxu0 0
  %784 = vmatprep.subr.bf16.mxu0 0
  %785 = vmatpush1.bf16.msra.mxu0 0
  %786 = vmatprep.subr.bf16.mxu0 0
  %787 = vmatpush1.bf16.msra.mxu0 %v776
  %788 = vmatprep.subr.bf16.mxu0 0
  %789 = vmatpush1.bf16.msra.mxu0 %v755
  %790 = vmatprep.subr.bf16.mxu0 0
  %791 = vmatpush1.bf16.msra.mxu0 %v754
  %792 = vmatprep.subr.bf16.mxu0 0
  %793 = vmatpush1.bf16.msra.mxu0 %v753
  %794 = vmatprep.subr.bf16.mxu0 0
  %795 = vmatpush2.bf16.msra.mxu0 0
  %796 = vmatprep.subr.bf16.mxu0 0
  %797 = vmatpush2.bf16.msra.mxu0 0
  %798 = vmatprep.subr.bf16.mxu0 0
  %799 = vmatpush2.bf16.msra.mxu0 0
  %800 = vmatprep.subr.bf16.mxu0 0
  %801 = vmatpush2.bf16.msra.mxu0 0
  %802 = vmatprep.subr.bf16.mxu0 0
  %803 = vmatpush2.bf16.msra.mxu0 0
  %804 = vmatprep.subr.bf16.mxu0 0
  %805 = vmatpush2.bf16.msra.mxu0 0
  %806 = vmatprep.subr.bf16.mxu0 0
  %807 = vmatpush2.bf16.msra.mxu0 0
  %808 = vmatprep.subr.bf16.mxu0 0
  %809 = vmatpush2.bf16.msra.mxu0 0
  %810 = vmatprep.mubr.bf16.mxu0 0
  %811 = vmatmul.mubr.bf16.gmra.mxu0 %v767
  %v812 = vpop.f32.mrf.mxu0
  %v813 = vadd.f32 0.0, %v812
  %v814 = vpop.f32.mrf.mxu0
  %v815 = vpop.f32.mrf.mxu0
  %v816 = vadd.f32 0.0, %v815
  %v817 = vpop.f32.mrf.mxu0
  %818 = vmatprep.mubr.bf16.mxu0 0
  %819 = vmatmul.mubr.bf16.gmra.mxu0 %v770
  %v820 = vpop.f32.mrf.mxu0
  %v821 = vadd.f32 0.0, %v820
  %v822 = vpop.f32.mrf.mxu0
  %v823 = vpop.f32.mrf.mxu0
  %v824 = vpop.f32.mrf.mxu0
  %825 = vdwg.mxu0
  %v826 = vld [vmem:[%s2] sm:$0xff]
  %v827 = vld [vmem:[%s2 + $0x8] sm:$0xff]
  %v828 = vld [vmem:[%s2 + $0x10] sm:$0xff]
  %v829 = vld [vmem:[%s2 + $0x18] sm:$0xff]
  %v830 = vld [vmem:[%s2 + $0x20] sm:$0xff]
  %v831 = vld [vmem:[%s2 + $0x28] sm:$0xff]
  %v832 = vld [vmem:[%s2 + $0x30] sm:$0xff]
  %v833 = vld [vmem:[%s2 + $0x38] sm:$0xff]
  %v834 = vld [vmem:[%s2 + $0x40] sm:$0xff]
  %v835 = vld [vmem:[%s0] sm:$0xf]
  %v836 = vld [vmem:[%s0 + $0x4] sm:$0xf]
  %v837 = vld [vmem:[%s0 + $0x8] sm:$0xf]
  %v838 = vld [vmem:[%s0 + $0xc] sm:$0xf]
  %v839 = vld [vmem:[%s0 + $0x10] sm:$0xf]
  %v840 = vld [vmem:[%s0 + $0x14] sm:$0xf]
  %v841 = vld [vmem:[%s0 + $0x18] sm:$0xf]
  %v842 = vld [vmem:[%s0 + $0x1c] sm:$0xf]
  %v843 = vld [vmem:[%s0 + $0x20] sm:$0xf]
  %v844 = vld [vmem:[%s0 + $0x24] sm:$0xf]
  %v845 = vld [vmem:[%s0 + $0x28] sm:$0xf]
  %v846 = vld [vmem:[%s0 + $0x2c] sm:$0xf]
  %v847 = vld [vmem:[%s0 + $0x30] sm:$0xf]
  %v848 = vld [vmem:[%s0 + $0x34] sm:$0xf]
  %v849 = vld [vmem:[%s0 + $0x38] sm:$0xf]
  %v850 = vld [vmem:[%s0 + $0x3c] sm:$0xf]
  %v851 = vld [vmem:[%s0 + $0x40] sm:$0xf]
  %v852 = vld [vmem:[%s0 + $0x44] sm:$0xf]
  %v853 = vld [vmem:[%s0 + $0x48] sm:$0xf]
  %v854 = vld [vmem:[%s0 + $0x4c] sm:$0xf]
  %v855 = vld [vmem:[%s0 + $0x50] sm:$0xf]
  %v856 = vld [vmem:[%s0 + $0x54] sm:$0xf]
  %v857 = vld [vmem:[%s0 + $0x58] sm:$0xf]
  %v858 = vld [vmem:[%s0 + $0x5c] sm:$0xf]
  %v859 = vld [vmem:[%s0 + $0x60] sm:$0xf]
  %v860 = vld [vmem:[%s0 + $0x64] sm:$0xf]
  %v861 = vld [vmem:[%s0 + $0x68] sm:$0xf]
  %v862 = vld [vmem:[%s0 + $0x6c] sm:$0xf]
  %v863 = vld [vmem:[%s0 + $0x70] sm:$0xf]
  %v864 = vld [vmem:[%s0 + $0x74] sm:$0xf]
  %v865 = vld [vmem:[%s0 + $0x78] sm:$0xf]
  %v866 = vld [vmem:[%s0 + $0x7c] sm:$0xf]
  %v867 = vld [vmem:[%s4] sm:$0xff]
  %v868 = vld [vmem:[%s4 + $0x8] sm:$0xff]
  %v869 = vld [vmem:[%s4 + $0x10] sm:$0xff]
  %v870 = vld [vmem:[%s4 + $0x18] sm:$0xff]
  %v871 = vld [vmem:[%s4 + $0x20] sm:$0xff]
  %v872 = vld [vmem:[%s4 + $0x28] sm:$0xff]
  %v873 = vld [vmem:[%s4 + $0x30] sm:$0xff]
  %v874 = vld [vmem:[%s4 + $0x38] sm:$0xff]
  %v875 = vld [vmem:[%s4 + $0x40] sm:$0xff]
  %877 = vset.pattern.permute.xlu0 0
  %878 = vperm.xlu0 %877, %v867
  %v879 = vpop.permute.xlu0 %878
  %882 = vset.pattern.permute.xlu0 0
  %883 = vperm.xlu0 %882, %v868
  %v884 = vpop.permute.xlu0 %883
  %887 = vset.pattern.permute.xlu0 0
  %888 = vperm.xlu0 %887, %v869
  %v889 = vpop.permute.xlu0 %888
  %892 = vset.pattern.permute.xlu0 0
  %893 = vperm.xlu0 %892, %v870
  %v894 = vpop.permute.xlu0 %893
  %897 = vset.pattern.permute.xlu0 0
  %898 = vperm.xlu0 %897, %v871
  %v899 = vpop.permute.xlu0 %898
  %902 = vset.pattern.permute.xlu0 0
  %903 = vperm.xlu0 %902, %v872
  %v904 = vpop.permute.xlu0 %903
  %907 = vset.pattern.permute.xlu0 0
  %908 = vperm.xlu0 %907, %v873
  %v909 = vpop.permute.xlu0 %908
  %912 = vset.pattern.permute.xlu0 0
  %913 = vperm.xlu0 %912, %v874
  %v914 = vpop.permute.xlu0 %913
  %917 = vset.pattern.permute.xlu0 0
  %918 = vperm.xlu0 %917, %v875
  %v919 = vpop.permute.xlu0 %918
  %v930 = vunpack.c.l.b16 %v826
  %v931 = vunpack.c.h.b16 %v826
  %v932 = vunpack.c.l.b16 %v827
  %v933 = vunpack.c.h.b16 %v827
  %v934 = vunpack.c.l.b16 %v828
  %v935 = vunpack.c.h.b16 %v828
  %v936 = vunpack.c.l.b16 %v829
  %v937 = vunpack.c.h.b16 %v829
  %v938 = vunpack.c.l.b16 %v830
  %v939 = vunpack.c.h.b16 %v830
  %v940 = vunpack.c.l.b16 %v831
  %v941 = vunpack.c.h.b16 %v831
  %v942 = vunpack.c.l.b16 %v832
  %v943 = vunpack.c.h.b16 %v832
  %v944 = vunpack.c.l.b16 %v833
  %v945 = vunpack.c.h.b16 %v833
  %v946 = vunpack.c.l.b16 %v834
  %v947 = vunpack.c.h.b16 %v834
  %v948 = vpack.c.b16 %v932, %v930
  %v949 = vpack.c.b16 %v933, %v931
  %v950 = vpack.c.b16 %v936, %v934
  %v951 = vpack.c.b16 %v937, %v935
  %v952 = vpack.c.b16 %v940, %v938
  %v953 = vpack.c.b16 %v941, %v939
  %v954 = vpack.c.b16 %v944, %v942
  %v955 = vpack.c.b16 %v945, %v943
  %v956 = vpack.c.b16 %v946, %v946
  %v957 = vpack.c.b16 %v947, %v947
  %v1000 = vunpack.c.l.b16 %v835
  %v1001 = vunpack.c.l.b16 %v836
  %v1002 = vunpack.c.l.b16 %v837
  %v1003 = vunpack.c.l.b16 %v838
  %v1004 = vunpack.c.l.b16 %v839
  %v1005 = vunpack.c.l.b16 %v840
  %v1006 = vunpack.c.l.b16 %v841
  %v1007 = vunpack.c.l.b16 %v842
  %v1008 = vunpack.c.l.b16 %v843
  %v1009 = vunpack.c.l.b16 %v844
  %v1010 = vunpack.c.l.b16 %v845
  %v1011 = vunpack.c.l.b16 %v846
  %v1012 = vunpack.c.l.b16 %v847
  %v1013 = vunpack.c.l.b16 %v848
  %v1014 = vunpack.c.l.b16 %v849
  %v1015 = vunpack.c.l.b16 %v850
  %v1016 = vunpack.c.l.b16 %v851
  %v1017 = vunpack.c.l.b16 %v852
  %v1018 = vunpack.c.l.b16 %v853
  %v1019 = vunpack.c.l.b16 %v854
  %v1020 = vunpack.c.l.b16 %v855
  %v1021 = vunpack.c.l.b16 %v856
  %v1022 = vunpack.c.l.b16 %v857
  %v1023 = vunpack.c.l.b16 %v858
  %v1024 = vunpack.c.l.b16 %v859
  %v1025 = vunpack.c.l.b16 %v860
  %v1026 = vunpack.c.l.b16 %v861
  %v1027 = vunpack.c.l.b16 %v862
  %v1028 = vunpack.c.l.b16 %v863
  %v1029 = vunpack.c.l.b16 %v864
  %v1030 = vunpack.c.l.b16 %v865
  %v1031 = vunpack.c.l.b16 %v866
  %v1032 = vpack.c.b16 %v1001, %v1000
  %v1033 = vpack.c.b16 %v1003, %v1002
  %v1034 = vpack.c.b16 %v1005, %v1004
  %v1035 = vpack.c.b16 %v1007, %v1006
  %v1036 = vpack.c.b16 %v1009, %v1008
  %v1037 = vpack.c.b16 %v1011, %v1010
  %v1038 = vpack.c.b16 %v1013, %v1012
  %v1039 = vpack.c.b16 %v1015, %v1014
  %v1040 = vpack.c.b16 %v1017, %v1016
  %v1041 = vpack.c.b16 %v1019, %v1018
  %v1042 = vpack.c.b16 %v1021, %v1020
  %v1043 = vpack.c.b16 %v1023, %v1022
  %v1044 = vpack.c.b16 %v1025, %v1024
  %v1045 = vpack.c.b16 %v1027, %v1026
  %v1046 = vpack.c.b16 %v1029, %v1028
  %v1047 = vpack.c.b16 %v1031, %v1030
  %1064 = vmatprep.subr.bf16.mxu0 0
  %1065 = vmatpush1.bf16.msra.mxu0 %v1039
  %1066 = vmatprep.subr.bf16.mxu0 0
  %1067 = vmatpush1.bf16.msra.mxu0 %v1038
  %1068 = vmatprep.subr.bf16.mxu0 0
  %1069 = vmatpush1.bf16.msra.mxu0 %v1037
  %1070 = vmatprep.subr.bf16.mxu0 0
  %1071 = vmatpush1.bf16.msra.mxu0 %v1036
  %1072 = vmatprep.subr.bf16.mxu0 0
  %1073 = vmatpush1.bf16.msra.mxu0 %v1035
  %1074 = vmatprep.subr.bf16.mxu0 0
  %1075 = vmatpush1.bf16.msra.mxu0 %v1034
  %1076 = vmatprep.subr.bf16.mxu0 0
  %1077 = vmatpush1.bf16.msra.mxu0 %v1033
  %1078 = vmatprep.subr.bf16.mxu0 0
  %1079 = vmatpush1.bf16.msra.mxu0 %v1032
  %1080 = vmatprep.subr.bf16.mxu0 0
  %1081 = vmatpush2.bf16.msra.mxu0 %v1047
  %1082 = vmatprep.subr.bf16.mxu0 0
  %1083 = vmatpush2.bf16.msra.mxu0 %v1046
  %1084 = vmatprep.subr.bf16.mxu0 0
  %1085 = vmatpush2.bf16.msra.mxu0 %v1045
  %1086 = vmatprep.subr.bf16.mxu0 0
  %1087 = vmatpush2.bf16.msra.mxu0 %v1044
  %1088 = vmatprep.subr.bf16.mxu0 0
  %1089 = vmatpush2.bf16.msra.mxu0 %v1043
  %1090 = vmatprep.subr.bf16.mxu0 0
  %1091 = vmatpush2.bf16.msra.mxu0 %v1042
  %1092 = vmatprep.subr.bf16.mxu0 0
  %1093 = vmatpush2.bf16.msra.mxu0 %v1041
  %1094 = vmatprep.subr.bf16.mxu0 0
  %1095 = vmatpush2.bf16.msra.mxu0 %v1040
  %1096 = vmatprep.mubr.bf16.mxu0 %v949
  %1097 = vmatmul.mubr.bf16.gmra.mxu0 %v948
  %v1098 = vpop.f32.mrf.mxu0
  %v1099 = vadd.f32 %v879, %v1098
  %v1100 = vpop.f32.mrf.mxu0
  %v1101 = vpop.f32.mrf.mxu0
  %v1102 = vadd.f32 %v884, %v1101
  %v1103 = vpop.f32.mrf.mxu0
  %1104 = vmatprep.mubr.bf16.mxu0 %v951
  %1105 = vmatmul.mubr.bf16.gmra.mxu0 %v950
  %v1106 = vpop.f32.mrf.mxu0
  %v1107 = vadd.f32 %v889, %v1106
  %v1108 = vpop.f32.mrf.mxu0
  %v1109 = vpop.f32.mrf.mxu0
  %v1110 = vadd.f32 %v894, %v1109
  %v1111 = vpop.f32.mrf.mxu0
  %1112 = vmatprep.mubr.bf16.mxu0 %v953
  %1113 = vmatmul.mubr.bf16.gmra.mxu0 %v952
  %v1114 = vpop.f32.mrf.mxu0
  %v1115 = vadd.f32 %v899, %v1114
  %v1116 = vpop.f32.mrf.mxu0
  %v1117 = vpop.f32.mrf.mxu0
  %v1118 = vadd.f32 %v904, %v1117
  %v1119 = vpop.f32.mrf.mxu0
  %1120 = vmatprep.mubr.bf16.mxu0 %v955
  %1121 = vmatmul.mubr.bf16.gmra.mxu0 %v954
  %v1122 = vpop.f32.mrf.mxu0
  %v1123 = vadd.f32 %v909, %v1122
  %v1124 = vpop.f32.mrf.mxu0
  %v1125 = vpop.f32.mrf.mxu0
  %v1126 = vadd.f32 %v914, %v1125
  %v1127 = vpop.f32.mrf.mxu0
  %1128 = vmatprep.mubr.bf16.mxu0 %v957
  %1129 = vmatmul.mubr.bf16.gmra.mxu0 %v956
  %v1130 = vpop.f32.mrf.mxu0
  %v1131 = vadd.f32 %v919, %v1130
  %v1132 = vpop.f32.mrf.mxu0
  %v1133 = vpop.f32.mrf.mxu0
  %v1134 = vpop.f32.mrf.mxu0
  %1135 = vdwg.mxu0
  %v1136 = vmax.f32 %v1099, 0.0
  %v1137 = vmax.f32 %v1102, 0.0
  %v1138 = vmax.f32 %v1107, 0.0
  %v1139 = vmax.f32 %v1110, 0.0
  %v1140 = vmax.f32 %v1115, 0.0
  %v1141 = vmax.f32 %v1118, 0.0
  %v1142 = vmax.f32 %v1123, 0.0
  %v1143 = vmax.f32 %v1126, 0.0
  %v1144 = vmax.f32 %v1131, 0.0
  %v1145 = vmul.f32 %v813, %v1136
  %v1146 = vmul.f32 %v816, %v1137
  %v1147 = vmul.f32 %v821, %v1138
  %v1148 = vadd.f32 %v1145, %v1146
  %v1149 = vadd.f32 %v1148, %v1147
  %v1150 = vrot.slane %v1149, 4
  %v1151 = vadd.f32 %v1149, %v1150
  %v1152 = vrot.slane %v1151, 2
  %v1153 = vadd.f32 %v1151, %v1152
  %v1154 = vrot.slane %v1153, 1
  %v1155 = vadd.f32 %v1153, %v1154
  %v1156 = vmul.f32 %v1155, 0.20412415
  %v1157 = vmul.f32 %v813, %v1139
  %v1158 = vmul.f32 %v816, %v1140
  %v1159 = vmul.f32 %v821, %v1141
  %v1160 = vadd.f32 %v1157, %v1158
  %v1161 = vadd.f32 %v1160, %v1159
  %v1162 = vrot.slane %v1161, 4
  %v1163 = vadd.f32 %v1161, %v1162
  %v1164 = vrot.slane %v1163, 2
  %v1165 = vadd.f32 %v1163, %v1164
  %v1166 = vrot.slane %v1165, 1
  %v1167 = vadd.f32 %v1165, %v1166
  %v1168 = vmul.f32 %v1167, 0.20412415
  %v1169 = vmul.f32 %v813, %v1142
  %v1170 = vmul.f32 %v816, %v1143
  %v1171 = vmul.f32 %v821, %v1144
  %v1172 = vadd.f32 %v1169, %v1170
  %v1173 = vadd.f32 %v1172, %v1171
  %v1174 = vrot.slane %v1173, 4
  %v1175 = vadd.f32 %v1173, %v1174
  %v1176 = vrot.slane %v1175, 2
  %v1177 = vadd.f32 %v1175, %v1176
  %v1178 = vrot.slane %v1177, 1
  %v1179 = vadd.f32 %v1177, %v1178
  %v1180 = vmul.f32 %v1179, 0.20412415
  %v1181 = vmax.f32 %v1168, %v1180
  %v1182 = vmax.f32 %v1156, %v1181
  %v1183 = vsub.f32 %v1156, %v1182
  %v1184 = vmul.f32 %v1183, 1.442695
  %v1185 = vpow.pop %v1184
  %v1186 = vsub.f32 %v1168, %v1182
  %v1187 = vmul.f32 %v1186, 1.442695
  %v1188 = vpow.pop %v1187
  %v1189 = vsub.f32 %v1180, %v1182
  %v1190 = vmul.f32 %v1189, 1.442695
  %v1191 = vpow.pop %v1190
  %v1192 = vadd.f32 %v1185, %v1188
  %v1193 = vadd.f32 %v1192, %v1191
  %v1194 = vrcp.pop %v1193
  %v1195 = vmul.f32 %v1185, %v1136
  %v1196 = vmul.f32 %v1185, %v1137
  %v1197 = vmul.f32 %v1185, %v1138
  %v1198 = vmul.f32 %v1188, %v1139
  %v1199 = vmul.f32 %v1188, %v1140
  %v1200 = vmul.f32 %v1188, %v1141
  %v1201 = vadd.f32 %v1195, %v1198
  %v1202 = vadd.f32 %v1196, %v1199
  %v1203 = vadd.f32 %v1197, %v1200
  %v1204 = vmul.f32 %v1191, %v1142
  %v1205 = vmul.f32 %v1191, %v1143
  %v1206 = vmul.f32 %v1191, %v1144
  %v1207 = vadd.f32 %v1201, %v1204
  %v1208 = vadd.f32 %v1202, %v1205
  %v1209 = vadd.f32 %v1203, %v1206
  %v1210 = vmul.f32 %v1207, %v1194
  %v1211 = vmul.f32 %v1208, %v1194
  %v1212 = vmul.f32 %v1209, %v1194
  %v1213 = vld [vmem:[%s4 + $0x48] sm:$0xff]
  %v1214 = vld [vmem:[%s4 + $0x50] sm:$0xff]
  %v1215 = vld [vmem:[%s4 + $0x58] sm:$0xff]
  %v1216 = vld [vmem:[%s4 + $0x60] sm:$0xff]
  %v1217 = vld [vmem:[%s4 + $0x68] sm:$0xff]
  %v1218 = vld [vmem:[%s4 + $0x70] sm:$0xff]
  %1220 = vset.pattern.permute.xlu0 0
  %1221 = vperm.xlu0 %1220, %v1213
  %v1222 = vpop.permute.xlu0 %1221
  %1225 = vset.pattern.permute.xlu0 0
  %1226 = vperm.xlu0 %1225, %v1214
  %v1227 = vpop.permute.xlu0 %1226
  %1230 = vset.pattern.permute.xlu0 0
  %1231 = vperm.xlu0 %1230, %v1215
  %v1232 = vpop.permute.xlu0 %1231
  %v1234 = vmul.f32 %v1210, %v1222
  %v1235 = vmul.f32 %v1211, %v1227
  %v1236 = vmul.f32 %v1212, %v1232
  %v1237 = vadd.f32 %v1234, %v1235
  %v1238 = vadd.f32 %v1237, %v1236
  %v1239 = vrot.slane %v1238, 4
  %v1240 = vadd.f32 %v1238, %v1239
  %v1241 = vrot.slane %v1240, 2
  %v1242 = vadd.f32 %v1240, %v1241
  %v1243 = vrot.slane %v1242, 1
  %v1244 = vadd.f32 %v1242, %v1243
  %1246 = vset.pattern.permute.xlu0 0
  %1247 = vperm.xlu0 %1246, %v1216
  %v1248 = vpop.permute.xlu0 %1247
  %1251 = vset.pattern.permute.xlu0 0
  %1252 = vperm.xlu0 %1251, %v1217
  %v1253 = vpop.permute.xlu0 %1252
  %1256 = vset.pattern.permute.xlu0 0
  %1257 = vperm.xlu0 %1256, %v1218
  %v1258 = vpop.permute.xlu0 %1257
  %v1260 = vmul.f32 %v813, %v1248
  %v1261 = vmul.f32 %v816, %v1253
  %v1262 = vmul.f32 %v821, %v1258
  %v1263 = vadd.f32 %v1260, %v1261
  %v1264 = vadd.f32 %v1263, %v1262
  %v1265 = vrot.slane %v1264, 4
  %v1266 = vadd.f32 %v1264, %v1265
  %v1267 = vrot.slane %v1266, 2
  %v1268 = vadd.f32 %v1266, %v1267
  %v1269 = vrot.slane %v1268, 1
  %v1270 = vadd.f32 %v1268, %v1269
  %v1271 = vadd.f32 %v1244, %v1270
  %v1272 = vld [vmem:[%s4 + $0x78] sm:$0x1]
  %1274 = vset.pattern.permute.xlu0 0
  %1275 = vperm.xlu0 %1274, %v1272
  %v1276 = vpop.permute.xlu0 %1275
  %v1278 = vadd.f32 %v1271, %v1276
  %1279 = vst [vmem:[%s5] sm:$0x1] %v1278
  // Predicated region
  $region22: #{mmcaf_forward.1} parent=0 // pred_check
    _
  $region23: #{mmcaf_forward.1} parent=0 // pred_check_branch
    %1281 = sbr.rel (0) target = $region25
  $region24: #{mmcaf_forward.1} parent=0 // pred_region
    _
  $region25: #{mmcaf_forward.1} parent=0 // pred_fallthru
    _
  // Predicated region
  $region26: #{mmcaf_forward.1} parent=0 // pred_check
    _
  $region27: #{mmcaf_forward.1} parent=0 // pred_check_branch
    %1283 = sbr.rel (0) target = $region29
  $region28: #{mmcaf_forward.1} parent=0 // pred_region
    _
  $region29: #{mmcaf_forward.1} parent=0 // pred_fallthru
    _

</llo_original>
